<compile_context>
chip_gen: v7x
topology: tpu7x:2x2x1
jax: 0.10.0
libtpu: 0.0.40
codegen_flags: <defaults>
</compile_context>

<pallas_src>
import numbers

import jax
import jax.numpy as jnp
from jax.experimental import pallas as pl
from jax.experimental.pallas import tpu as pltpu


_LANES = 128


# ----------------------------- host-side glue ------------------------------

def param_to_tuple(param, name, center=1.0, bounds=(0.0, float("inf"))):
    if isinstance(param, (list, tuple)):
        if len(param) != 2:
            raise ValueError(f"{name} must have two bounds")
        return (max(bounds[0], param[0]), min(bounds[1], param[1]))
    if not isinstance(param, numbers.Number):
        raise ValueError(f"{name} must be a number or a pair")
    if param == 0:
        return None
    minval = max(center - param, bounds[0])
    maxval = min(center + param, bounds[1])
    return (minval, maxval)


def apply_all(x, func):
    if isinstance(x, (list, tuple)):
        return [func(t) for t in x]
    return func(x)


# ------------------------------ Pallas kernel -------------------------------

def _color_jitter_kernel(factors_ref, means_ref, x_ref, o_ref):
    # factors_ref: SMEM (4,) f32 -> [brightness, contrast, saturation, hue]
    # means_ref:   SMEM (N,) f32 -> per-image mean of gray(brightness-adjusted)
    # x_ref/o_ref: VMEM (1, 3, TR, 128)
    bf = factors_ref[0]
    cf = factors_ref[1]
    sf = factors_ref[2]
    hf = factors_ref[3]
    mean = means_ref[pl.program_id(0)]

    r = x_ref[0, 0, :, :]
    g = x_ref[0, 1, :, :]
    b = x_ref[0, 2, :, :]

    # --- adjust_brightness: blend with black ---
    r = jnp.clip(r * bf, 0.0, 1.0)
    g = jnp.clip(g * bf, 0.0, 1.0)
    b = jnp.clip(b * bf, 0.0, 1.0)

    # --- adjust_contrast: blend with the (precomputed) whole-image gray mean ---
    c_off = (1.0 - cf) * mean
    r = jnp.clip(cf * r + c_off, 0.0, 1.0)
    g = jnp.clip(cf * g + c_off, 0.0, 1.0)
    b = jnp.clip(cf * b + c_off, 0.0, 1.0)

    # --- adjust_saturation: blend with per-pixel grayscale ---
    gray = 0.2989 * r + 0.587 * g + 0.114 * b
    s_off = (1.0 - sf) * gray
    r = jnp.clip(sf * r + s_off, 0.0, 1.0)
    g = jnp.clip(sf * g + s_off, 0.0, 1.0)
    b = jnp.clip(sf * b + s_off, 0.0, 1.0)

    # --- adjust_hue: RGB -> HSV, shift hue, HSV -> RGB ---
    maxc = jnp.maximum(jnp.maximum(r, g), b)
    minc = jnp.minimum(jnp.minimum(r, g), b)
    eqc = maxc == minc
    cr = maxc - minc
    ones = jnp.ones_like(maxc)

    # Divides -> EUP reciprocals (free VLIW slot in this VALU-bound kernel).
    s = cr * pl.reciprocal(jnp.where(eqc, ones, maxc), approx=True)
    s = jnp.minimum(s, 1.0)  # guard against approx-reciprocal overshoot
    inv_cr = pl.reciprocal(jnp.where(eqc, ones, cr), approx=True)
    rc = (maxc - r) * inv_cr
    gc = (maxc - g) * inv_cr
    bc = (maxc - b) * inv_cr

    max_is_r = maxc == r
    max_is_g = maxc == g
    hr = jnp.where(max_is_r, bc - gc, 0.0)
    hg = jnp.where(max_is_g & ~max_is_r, 2.0 + rc - bc, 0.0)
    hb = jnp.where(~max_is_g & ~max_is_r, 4.0 + gc - rc, 0.0)

    # Hue kept in "sixths": hr+hg+hb in [-1, 5], hf*6 in [-3, 3]; two cheap
    # range corrections replace the generic jnp.mod of the reference code.
    h6 = hr + hg + hb + hf * 6.0
    h6 = jnp.where(h6 < 0.0, h6 + 6.0, h6)
    h6 = jnp.where(h6 >= 6.0, h6 - 6.0, h6)

    v = maxc
    i_f = jnp.floor(h6)
    f = h6 - i_f
    sector = jnp.minimum(i_f, 5.0)  # replaces int mod-6; kept in float

    # p/q/t already lie in [0, 1] (v, s, f all in [0, 1]) -> no clips needed.
    p = v * (1.0 - s)
    q = v * (1.0 - s * f)
    t = v * (1.0 - s * (1.0 - f))

    def sel(c0, c1, c2, c3, c4, c5):
        return jnp.where(sector == 0.0, c0,
               jnp.where(sector == 1.0, c1,
               jnp.where(sector == 2.0, c2,
               jnp.where(sector == 3.0, c3,
               jnp.where(sector == 4.0, c4, c5)))))

    # Per-channel stores (torchvision HSV->RGB table); no concatenate / extra
    # (3, HW) temporary.
    o_ref[0, 0, :, :] = sel(v, q, p, p, t, v).astype(o_ref.dtype)
    o_ref[0, 1, :, :] = sel(t, v, v, q, p, p).astype(o_ref.dtype)
    o_ref[0, 2, :, :] = sel(p, p, t, v, v, q).astype(o_ref.dtype)


def color_jitter_pallas(x, factors, tile_rows=512):
    """x: (N, 3, H, W) float32 in [0, 1]; factors: (4,) f32 [bf, cf, sf, hf]."""
    n, c, h, w = x.shape
    assert c == 3, "ColorJitter kernel expects 3-channel RGB input"
    hw = h * w

    # Per-image mean of gray(brightness-adjusted image): one scalar per image,
    # computed as a tiny XLA reduction so the Pallas kernel can tile the
    # spatial axis freely without changing adjust_contrast semantics.
    bf = factors[0]
    xb = jnp.clip(x.astype(jnp.float32) * bf, 0.0, 1.0)
    gray = 0.2989 * xb[:, 0] + 0.587 * xb[:, 1] + 0.114 * xb[:, 2]
    means = jnp.mean(gray, axis=(1, 2)).astype(jnp.float32)  # (N,)

    # Sublane-dense layout: flatten HW and tile it as (rows, 128) slabs.
    rows = pl.cdiv(hw, _LANES)
    tr = min(tile_rows, rows)
    rows_p = pl.cdiv(rows, tr) * tr
    hw_p = rows_p * _LANES

    x_flat = x.reshape(n, c, hw)
    if hw_p != hw:
        x_flat = jnp.pad(x_flat, ((0, 0), (0, 0), (0, hw_p - hw)))
    x_tiled = x_flat.reshape(n, c, rows_p, _LANES)

    out_tiled = pl.pallas_call(
        _color_jitter_kernel,
        out_shape=jax.ShapeDtypeStruct((n, c, rows_p, _LANES), x.dtype),
        grid_spec=pl.GridSpec(
            grid=(n, rows_p // tr),
            in_specs=[
                pl.BlockSpec(memory_space=pltpu.SMEM),   # jitter factors (4,)
                pl.BlockSpec(memory_space=pltpu.SMEM),   # per-image gray means
                pl.BlockSpec((1, c, tr, _LANES), lambda i, j: (i, 0, j, 0)),
            ],
            out_specs=pl.BlockSpec((1, c, tr, _LANES), lambda i, j: (i, 0, j, 0)),
        ),
        compiler_params=pltpu.CompilerParams(
            dimension_semantics=("parallel", "parallel"),
            vmem_limit_bytes=32 * 1024 * 1024),
    )(factors, means, x_tiled)

    out_flat = out_tiled.reshape(n, c, hw_p)[:, :, :hw]
    return out_flat.reshape(n, c, h, w)


class ColorJitterJax:
    """Mirror of the PyTorch ColorJitter module; hot path runs in Pallas.

    Note: the reference module applies brightness/contrast/saturation/hue in
    this FIXED order (no random permutation), which is what the kernel does.
    """

    def __init__(self, brightness=0, contrast=0, saturation=0, hue=0):
        self.brightness = param_to_tuple(brightness, "ColorJitter.brightness")
        self.contrast = param_to_tuple(contrast, "ColorJitter.contrast")
        self.saturation = param_to_tuple(saturation, "ColorJitter.saturation")
        self.hue = param_to_tuple(hue, "ColorJitter.hue", center=0,
                                  bounds=[-0.5, 0.5])

    def get_params(self, key):
        def draw(k, bounds, neutral):
            if bounds is None:
                # TODO(synk): a None factor means "skip this adjustment"; we
                # substitute the identity factor instead of branching (for hue
                # this still runs the HSV round-trip, identical up to fp).
                return jnp.float32(neutral)
            return jax.random.uniform(k, (), jnp.float32,
                                      minval=bounds[0], maxval=bounds[1])

        kb, kc, ks, kh = jax.random.split(key, 4)
        bf = draw(kb, self.brightness, 1.0)
        cf = draw(kc, self.contrast, 1.0)
        sf = draw(ks, self.saturation, 1.0)
        hf = draw(kh, self.hue, 0.0)
        return jnp.stack([bf, cf, sf, hf]).astype(jnp.float32)

    def __call__(self, x, key):
        factors = self.get_params(key)
        return apply_all(x, lambda y: color_jitter_pallas(y, factors))


# ---------------------------------- main ------------------------------------

if __name__ == "__main__":
    key = jax.random.PRNGKey(0)
    k_img, k_params = jax.random.split(key)

    # NCHW, 3-channel RGB image batch, values in [0, 1].
    x = jax.random.uniform(k_img, (2, 3, 16, 16), dtype=jnp.float32)

    jitter = ColorJitterJax(brightness=0.4, contrast=0.4, saturation=0.4, hue=0.1)
    out = jitter(x, k_params)
    out = jax.block_until_ready(out)

    assert out.shape == x.shape and out.dtype == x.dtype
    print("KERNEL_OK")
</pallas_src>

<mosaic_0001>
module attributes {stable_mosaic.version = 11 : i64} {
  func.func @_color_jitter_kernel(%arg0: i32, %arg1: i32, %arg2: memref<4xf32, #tpu.memory_space<smem>>, %arg3: memref<2xf32, #tpu.memory_space<smem>>, %arg4: memref<1x3x2x128xf32, #tpu.memory_space<vmem>>, %arg5: memref<1x3x2x128xf32, #tpu.memory_space<vmem>>) attributes {dimension_semantics = [#tpu.dimension_semantics<parallel>, #tpu.dimension_semantics<parallel>], iteration_bounds = array<i64: 2, 1>, scalar_prefetch = 0 : i64, scratch_operands = 0 : i64, tpu.core_type = #tpu.core_type<tc>, window_params = [{transform_indices = @transform_0, window_bounds = array<i64: 4>}, {transform_indices = @transform_1, window_bounds = array<i64: 2>}, {transform_indices = @transform_2, window_bounds = array<i64: 1, 3, 2, 128>}, {transform_indices = @transform_3, window_bounds = array<i64: 1, 3, 2, 128>}]} {
    %c0 = arith.constant 0 : index
    %0 = memref.load %arg2[%c0] : memref<4xf32, #tpu.memory_space<smem>>
    %c1 = arith.constant 1 : index
    %1 = memref.load %arg2[%c1] : memref<4xf32, #tpu.memory_space<smem>>
    %c2 = arith.constant 2 : index
    %2 = memref.load %arg2[%c2] : memref<4xf32, #tpu.memory_space<smem>>
    %c3 = arith.constant 3 : index
    %3 = memref.load %arg2[%c3] : memref<4xf32, #tpu.memory_space<smem>>
    %4 = arith.index_cast %arg0 : i32 to index
    %5 = memref.load %arg3[%4] : memref<2xf32, #tpu.memory_space<smem>>
    %c0_0 = arith.constant 0 : index
    %c0_1 = arith.constant 0 : index
    %c0_2 = arith.constant 0 : index
    %c0_3 = arith.constant 0 : index
    %6 = vector.load %arg4[%c0_0, %c0_1, %c0_2, %c0_3] : memref<1x3x2x128xf32, #tpu.memory_space<vmem>>, vector<1x1x2x128xf32>
    %7 = vector.shape_cast %6 : vector<1x1x2x128xf32> to vector<2x128xf32>
    %c0_4 = arith.constant 0 : index
    %c1_5 = arith.constant 1 : index
    %c0_6 = arith.constant 0 : index
    %c0_7 = arith.constant 0 : index
    %8 = vector.load %arg4[%c0_4, %c1_5, %c0_6, %c0_7] : memref<1x3x2x128xf32, #tpu.memory_space<vmem>>, vector<1x1x2x128xf32>
    %9 = vector.shape_cast %8 : vector<1x1x2x128xf32> to vector<2x128xf32>
    %c0_8 = arith.constant 0 : index
    %c2_9 = arith.constant 2 : index
    %c0_10 = arith.constant 0 : index
    %c0_11 = arith.constant 0 : index
    %10 = vector.load %arg4[%c0_8, %c2_9, %c0_10, %c0_11] : memref<1x3x2x128xf32, #tpu.memory_space<vmem>>, vector<1x1x2x128xf32>
    %11 = vector.shape_cast %10 : vector<1x1x2x128xf32> to vector<2x128xf32>
    %12 = vector.broadcast %0 : f32 to vector<2x128xf32>
    %13 = arith.mulf %7, %12 : vector<2x128xf32>
    %cst = arith.constant 0.000000e+00 : f32
    %cst_12 = arith.constant 1.000000e+00 : f32
    %14 = vector.broadcast %cst : f32 to vector<2x128xf32>
    %15 = arith.maximumf %14, %13 : vector<2x128xf32>
    %16 = vector.broadcast %cst_12 : f32 to vector<2x128xf32>
    %17 = arith.minimumf %16, %15 : vector<2x128xf32>
    %18 = vector.broadcast %0 : f32 to vector<2x128xf32>
    %19 = arith.mulf %9, %18 : vector<2x128xf32>
    %cst_13 = arith.constant 0.000000e+00 : f32
    %cst_14 = arith.constant 1.000000e+00 : f32
    %20 = vector.broadcast %cst_13 : f32 to vector<2x128xf32>
    %21 = arith.maximumf %20, %19 : vector<2x128xf32>
    %22 = vector.broadcast %cst_14 : f32 to vector<2x128xf32>
    %23 = arith.minimumf %22, %21 : vector<2x128xf32>
    %24 = vector.broadcast %0 : f32 to vector<2x128xf32>
    %25 = arith.mulf %11, %24 : vector<2x128xf32>
    %cst_15 = arith.constant 0.000000e+00 : f32
    %cst_16 = arith.constant 1.000000e+00 : f32
    %26 = vector.broadcast %cst_15 : f32 to vector<2x128xf32>
    %27 = arith.maximumf %26, %25 : vector<2x128xf32>
    %28 = vector.broadcast %cst_16 : f32 to vector<2x128xf32>
    %29 = arith.minimumf %28, %27 : vector<2x128xf32>
    %cst_17 = arith.constant 1.000000e+00 : f32
    %30 = arith.subf %cst_17, %1 : f32
    %31 = arith.mulf %30, %5 : f32
    %32 = vector.broadcast %1 : f32 to vector<2x128xf32>
    %33 = arith.mulf %32, %17 : vector<2x128xf32>
    %34 = vector.broadcast %31 : f32 to vector<2x128xf32>
    %35 = arith.addf %33, %34 : vector<2x128xf32>
    %cst_18 = arith.constant 0.000000e+00 : f32
    %cst_19 = arith.constant 1.000000e+00 : f32
    %36 = vector.broadcast %cst_18 : f32 to vector<2x128xf32>
    %37 = arith.maximumf %36, %35 : vector<2x128xf32>
    %38 = vector.broadcast %cst_19 : f32 to vector<2x128xf32>
    %39 = arith.minimumf %38, %37 : vector<2x128xf32>
    %40 = vector.broadcast %1 : f32 to vector<2x128xf32>
    %41 = arith.mulf %40, %23 : vector<2x128xf32>
    %42 = vector.broadcast %31 : f32 to vector<2x128xf32>
    %43 = arith.addf %41, %42 : vector<2x128xf32>
    %cst_20 = arith.constant 0.000000e+00 : f32
    %cst_21 = arith.constant 1.000000e+00 : f32
    %44 = vector.broadcast %cst_20 : f32 to vector<2x128xf32>
    %45 = arith.maximumf %44, %43 : vector<2x128xf32>
    %46 = vector.broadcast %cst_21 : f32 to vector<2x128xf32>
    %47 = arith.minimumf %46, %45 : vector<2x128xf32>
    %48 = vector.broadcast %1 : f32 to vector<2x128xf32>
    %49 = arith.mulf %48, %29 : vector<2x128xf32>
    %50 = vector.broadcast %31 : f32 to vector<2x128xf32>
    %51 = arith.addf %49, %50 : vector<2x128xf32>
    %cst_22 = arith.constant 0.000000e+00 : f32
    %cst_23 = arith.constant 1.000000e+00 : f32
    %52 = vector.broadcast %cst_22 : f32 to vector<2x128xf32>
    %53 = arith.maximumf %52, %51 : vector<2x128xf32>
    %54 = vector.broadcast %cst_23 : f32 to vector<2x128xf32>
    %55 = arith.minimumf %54, %53 : vector<2x128xf32>
    %cst_24 = arith.constant 2.989000e-01 : f32
    %56 = vector.broadcast %cst_24 : f32 to vector<2x128xf32>
    %57 = arith.mulf %56, %39 : vector<2x128xf32>
    %cst_25 = arith.constant 5.870000e-01 : f32
    %58 = vector.broadcast %cst_25 : f32 to vector<2x128xf32>
    %59 = arith.mulf %58, %47 : vector<2x128xf32>
    %60 = arith.addf %57, %59 : vector<2x128xf32>
    %cst_26 = arith.constant 1.140000e-01 : f32
    %61 = vector.broadcast %cst_26 : f32 to vector<2x128xf32>
    %62 = arith.mulf %61, %55 : vector<2x128xf32>
    %63 = arith.addf %60, %62 : vector<2x128xf32>
    %cst_27 = arith.constant 1.000000e+00 : f32
    %64 = arith.subf %cst_27, %2 : f32
    %65 = vector.broadcast %64 : f32 to vector<2x128xf32>
    %66 = arith.mulf %65, %63 : vector<2x128xf32>
    %67 = vector.broadcast %2 : f32 to vector<2x128xf32>
    %68 = arith.mulf %67, %39 : vector<2x128xf32>
    %69 = arith.addf %68, %66 : vector<2x128xf32>
    %cst_28 = arith.constant 0.000000e+00 : f32
    %cst_29 = arith.constant 1.000000e+00 : f32
    %70 = vector.broadcast %cst_28 : f32 to vector<2x128xf32>
    %71 = arith.maximumf %70, %69 : vector<2x128xf32>
    %72 = vector.broadcast %cst_29 : f32 to vector<2x128xf32>
    %73 = arith.minimumf %72, %71 : vector<2x128xf32>
    %74 = vector.broadcast %2 : f32 to vector<2x128xf32>
    %75 = arith.mulf %74, %47 : vector<2x128xf32>
    %76 = arith.addf %75, %66 : vector<2x128xf32>
    %cst_30 = arith.constant 0.000000e+00 : f32
    %cst_31 = arith.constant 1.000000e+00 : f32
    %77 = vector.broadcast %cst_30 : f32 to vector<2x128xf32>
    %78 = arith.maximumf %77, %76 : vector<2x128xf32>
    %79 = vector.broadcast %cst_31 : f32 to vector<2x128xf32>
    %80 = arith.minimumf %79, %78 : vector<2x128xf32>
    %81 = vector.broadcast %2 : f32 to vector<2x128xf32>
    %82 = arith.mulf %81, %55 : vector<2x128xf32>
    %83 = arith.addf %82, %66 : vector<2x128xf32>
    %cst_32 = arith.constant 0.000000e+00 : f32
    %cst_33 = arith.constant 1.000000e+00 : f32
    %84 = vector.broadcast %cst_32 : f32 to vector<2x128xf32>
    %85 = arith.maximumf %84, %83 : vector<2x128xf32>
    %86 = vector.broadcast %cst_33 : f32 to vector<2x128xf32>
    %87 = arith.minimumf %86, %85 : vector<2x128xf32>
    %88 = arith.maximumf %73, %80 : vector<2x128xf32>
    %89 = arith.maximumf %88, %87 : vector<2x128xf32>
    %90 = arith.minimumf %73, %80 : vector<2x128xf32>
    %91 = arith.minimumf %90, %87 : vector<2x128xf32>
    %92 = arith.cmpf oeq, %89, %91 : vector<2x128xf32>
    %93 = arith.subf %89, %91 : vector<2x128xf32>
    %cst_34 = arith.constant 1.000000e+00 : f32
    %94 = vector.broadcast %cst_34 : f32 to vector<2x128xf32>
    %95 = arith.select %92, %94, %89 : vector<2x128xi1>, vector<2x128xf32>
    %96 = tpu.reciprocal %95 {approx = true} : vector<2x128xf32> -> vector<2x128xf32>
    %97 = arith.mulf %93, %96 : vector<2x128xf32>
    %cst_35 = arith.constant 1.000000e+00 : f32
    %98 = vector.broadcast %cst_35 : f32 to vector<2x128xf32>
    %99 = arith.minimumf %97, %98 : vector<2x128xf32>
    %100 = arith.select %92, %94, %93 : vector<2x128xi1>, vector<2x128xf32>
    %101 = tpu.reciprocal %100 {approx = true} : vector<2x128xf32> -> vector<2x128xf32>
    %102 = arith.subf %89, %73 : vector<2x128xf32>
    %103 = arith.mulf %102, %101 : vector<2x128xf32>
    %104 = arith.subf %89, %80 : vector<2x128xf32>
    %105 = arith.mulf %104, %101 : vector<2x128xf32>
    %106 = arith.subf %89, %87 : vector<2x128xf32>
    %107 = arith.mulf %106, %101 : vector<2x128xf32>
    %108 = arith.cmpf oeq, %89, %73 : vector<2x128xf32>
    %109 = arith.cmpf oeq, %89, %80 : vector<2x128xf32>
    %110 = arith.subf %107, %105 : vector<2x128xf32>
    %cst_36 = arith.constant 0.000000e+00 : f32
    %111 = vector.broadcast %cst_36 : f32 to vector<2x128xf32>
    %112 = arith.select %108, %110, %111 : vector<2x128xi1>, vector<2x128xf32>
    %cst_37 = arith.constant dense<true> : vector<2x128xi1>
    %113 = arith.xori %108, %cst_37 : vector<2x128xi1>
    %114 = arith.andi %109, %113 : vector<2x128xi1>
    %cst_38 = arith.constant 2.000000e+00 : f32
    %115 = vector.broadcast %cst_38 : f32 to vector<2x128xf32>
    %116 = arith.addf %115, %103 : vector<2x128xf32>
    %117 = arith.subf %116, %107 : vector<2x128xf32>
    %cst_39 = arith.constant 0.000000e+00 : f32
    %118 = vector.broadcast %cst_39 : f32 to vector<2x128xf32>
    %119 = arith.select %114, %117, %118 : vector<2x128xi1>, vector<2x128xf32>
    %cst_40 = arith.constant dense<true> : vector<2x128xi1>
    %120 = arith.xori %109, %cst_40 : vector<2x128xi1>
    %cst_41 = arith.constant dense<true> : vector<2x128xi1>
    %121 = arith.xori %108, %cst_41 : vector<2x128xi1>
    %122 = arith.andi %120, %121 : vector<2x128xi1>
    %cst_42 = arith.constant 4.000000e+00 : f32
    %123 = vector.broadcast %cst_42 : f32 to vector<2x128xf32>
    %124 = arith.addf %123, %105 : vector<2x128xf32>
    %125 = arith.subf %124, %103 : vector<2x128xf32>
    %cst_43 = arith.constant 0.000000e+00 : f32
    %126 = vector.broadcast %cst_43 : f32 to vector<2x128xf32>
    %127 = arith.select %122, %125, %126 : vector<2x128xi1>, vector<2x128xf32>
    %128 = arith.addf %112, %119 : vector<2x128xf32>
    %129 = arith.addf %128, %127 : vector<2x128xf32>
    %cst_44 = arith.constant 6.000000e+00 : f32
    %130 = arith.mulf %3, %cst_44 : f32
    %131 = vector.broadcast %130 : f32 to vector<2x128xf32>
    %132 = arith.addf %129, %131 : vector<2x128xf32>
    %cst_45 = arith.constant 0.000000e+00 : f32
    %133 = vector.broadcast %cst_45 : f32 to vector<2x128xf32>
    %134 = arith.cmpf olt, %132, %133 : vector<2x128xf32>
    %cst_46 = arith.constant 6.000000e+00 : f32
    %135 = vector.broadcast %cst_46 : f32 to vector<2x128xf32>
    %136 = arith.addf %132, %135 : vector<2x128xf32>
    %137 = arith.select %134, %136, %132 : vector<2x128xi1>, vector<2x128xf32>
    %cst_47 = arith.constant 6.000000e+00 : f32
    %138 = vector.broadcast %cst_47 : f32 to vector<2x128xf32>
    %139 = arith.cmpf oge, %137, %138 : vector<2x128xf32>
    %cst_48 = arith.constant 6.000000e+00 : f32
    %140 = vector.broadcast %cst_48 : f32 to vector<2x128xf32>
    %141 = arith.subf %137, %140 : vector<2x128xf32>
    %142 = arith.select %139, %141, %137 : vector<2x128xi1>, vector<2x128xf32>
    %143 = math.floor %142 : vector<2x128xf32>
    %144 = arith.subf %142, %143 : vector<2x128xf32>
    %cst_49 = arith.constant 5.000000e+00 : f32
    %145 = vector.broadcast %cst_49 : f32 to vector<2x128xf32>
    %146 = arith.minimumf %143, %145 : vector<2x128xf32>
    %cst_50 = arith.constant 1.000000e+00 : f32
    %147 = vector.broadcast %cst_50 : f32 to vector<2x128xf32>
    %148 = arith.subf %147, %99 : vector<2x128xf32>
    %149 = arith.mulf %89, %148 : vector<2x128xf32>
    %150 = arith.mulf %99, %144 : vector<2x128xf32>
    %cst_51 = arith.constant 1.000000e+00 : f32
    %151 = vector.broadcast %cst_51 : f32 to vector<2x128xf32>
    %152 = arith.subf %151, %150 : vector<2x128xf32>
    %153 = arith.mulf %89, %152 : vector<2x128xf32>
    %cst_52 = arith.constant 1.000000e+00 : f32
    %154 = vector.broadcast %cst_52 : f32 to vector<2x128xf32>
    %155 = arith.subf %154, %144 : vector<2x128xf32>
    %156 = arith.mulf %99, %155 : vector<2x128xf32>
    %cst_53 = arith.constant 1.000000e+00 : f32
    %157 = vector.broadcast %cst_53 : f32 to vector<2x128xf32>
    %158 = arith.subf %157, %156 : vector<2x128xf32>
    %159 = arith.mulf %89, %158 : vector<2x128xf32>
    %cst_54 = arith.constant 0.000000e+00 : f32
    %160 = vector.broadcast %cst_54 : f32 to vector<2x128xf32>
    %161 = arith.cmpf oeq, %146, %160 : vector<2x128xf32>
    %cst_55 = arith.constant 1.000000e+00 : f32
    %162 = vector.broadcast %cst_55 : f32 to vector<2x128xf32>
    %163 = arith.cmpf oeq, %146, %162 : vector<2x128xf32>
    %cst_56 = arith.constant 2.000000e+00 : f32
    %164 = vector.broadcast %cst_56 : f32 to vector<2x128xf32>
    %165 = arith.cmpf oeq, %146, %164 : vector<2x128xf32>
    %cst_57 = arith.constant 3.000000e+00 : f32
    %166 = vector.broadcast %cst_57 : f32 to vector<2x128xf32>
    %167 = arith.cmpf oeq, %146, %166 : vector<2x128xf32>
    %cst_58 = arith.constant 4.000000e+00 : f32
    %168 = vector.broadcast %cst_58 : f32 to vector<2x128xf32>
    %169 = arith.cmpf oeq, %146, %168 : vector<2x128xf32>
    %170 = arith.select %169, %159, %89 : vector<2x128xi1>, vector<2x128xf32>
    %171 = arith.select %167, %149, %170 : vector<2x128xi1>, vector<2x128xf32>
    %172 = arith.select %165, %149, %171 : vector<2x128xi1>, vector<2x128xf32>
    %173 = arith.select %163, %153, %172 : vector<2x128xi1>, vector<2x128xf32>
    %174 = arith.select %161, %89, %173 : vector<2x128xi1>, vector<2x128xf32>
    %c0_59 = arith.constant 0 : index
    %c0_60 = arith.constant 0 : index
    %c0_61 = arith.constant 0 : index
    %c0_62 = arith.constant 0 : index
    %175 = vector.load %arg5[%c0_59, %c0_60, %c0_61, %c0_62] : memref<1x3x2x128xf32, #tpu.memory_space<vmem>>, vector<1x1x2x128xf32>
    %176 = vector.shape_cast %175 : vector<1x1x2x128xf32> to vector<2x128xf32>
    %177 = vector.shape_cast %174 : vector<2x128xf32> to vector<1x1x2x128xf32>
    tpu.vector_store %arg5[%c0_59, %c0_60, %c0_61, %c0_62], %177 {strides = array<i32>} : memref<1x3x2x128xf32, #tpu.memory_space<vmem>>, vector<1x1x2x128xf32>,
    %cst_63 = arith.constant 0.000000e+00 : f32
    %178 = vector.broadcast %cst_63 : f32 to vector<2x128xf32>
    %179 = arith.cmpf oeq, %146, %178 : vector<2x128xf32>
    %cst_64 = arith.constant 1.000000e+00 : f32
    %180 = vector.broadcast %cst_64 : f32 to vector<2x128xf32>
    %181 = arith.cmpf oeq, %146, %180 : vector<2x128xf32>
    %cst_65 = arith.constant 2.000000e+00 : f32
    %182 = vector.broadcast %cst_65 : f32 to vector<2x128xf32>
    %183 = arith.cmpf oeq, %146, %182 : vector<2x128xf32>
    %cst_66 = arith.constant 3.000000e+00 : f32
    %184 = vector.broadcast %cst_66 : f32 to vector<2x128xf32>
    %185 = arith.cmpf oeq, %146, %184 : vector<2x128xf32>
    %cst_67 = arith.constant 4.000000e+00 : f32
    %186 = vector.broadcast %cst_67 : f32 to vector<2x128xf32>
    %187 = arith.cmpf oeq, %146, %186 : vector<2x128xf32>
    %188 = arith.select %187, %149, %149 : vector<2x128xi1>, vector<2x128xf32>
    %189 = arith.select %185, %153, %188 : vector<2x128xi1>, vector<2x128xf32>
    %190 = arith.select %183, %89, %189 : vector<2x128xi1>, vector<2x128xf32>
    %191 = arith.select %181, %89, %190 : vector<2x128xi1>, vector<2x128xf32>
    %192 = arith.select %179, %159, %191 : vector<2x128xi1>, vector<2x128xf32>
    %c0_68 = arith.constant 0 : index
    %c1_69 = arith.constant 1 : index
    %c0_70 = arith.constant 0 : index
    %c0_71 = arith.constant 0 : index
    %193 = vector.load %arg5[%c0_68, %c1_69, %c0_70, %c0_71] : memref<1x3x2x128xf32, #tpu.memory_space<vmem>>, vector<1x1x2x128xf32>
    %194 = vector.shape_cast %193 : vector<1x1x2x128xf32> to vector<2x128xf32>
    %195 = vector.shape_cast %192 : vector<2x128xf32> to vector<1x1x2x128xf32>
    tpu.vector_store %arg5[%c0_68, %c1_69, %c0_70, %c0_71], %195 {strides = array<i32>} : memref<1x3x2x128xf32, #tpu.memory_space<vmem>>, vector<1x1x2x128xf32>,
    %cst_72 = arith.constant 0.000000e+00 : f32
    %196 = vector.broadcast %cst_72 : f32 to vector<2x128xf32>
    %197 = arith.cmpf oeq, %146, %196 : vector<2x128xf32>
    %cst_73 = arith.constant 1.000000e+00 : f32
    %198 = vector.broadcast %cst_73 : f32 to vector<2x128xf32>
    %199 = arith.cmpf oeq, %146, %198 : vector<2x128xf32>
    %cst_74 = arith.constant 2.000000e+00 : f32
    %200 = vector.broadcast %cst_74 : f32 to vector<2x128xf32>
    %201 = arith.cmpf oeq, %146, %200 : vector<2x128xf32>
    %cst_75 = arith.constant 3.000000e+00 : f32
    %202 = vector.broadcast %cst_75 : f32 to vector<2x128xf32>
    %203 = arith.cmpf oeq, %146, %202 : vector<2x128xf32>
    %cst_76 = arith.constant 4.000000e+00 : f32
    %204 = vector.broadcast %cst_76 : f32 to vector<2x128xf32>
    %205 = arith.cmpf oeq, %146, %204 : vector<2x128xf32>
    %206 = arith.select %205, %89, %153 : vector<2x128xi1>, vector<2x128xf32>
    %207 = arith.select %203, %89, %206 : vector<2x128xi1>, vector<2x128xf32>
    %208 = arith.select %201, %159, %207 : vector<2x128xi1>, vector<2x128xf32>
    %209 = arith.select %199, %149, %208 : vector<2x128xi1>, vector<2x128xf32>
    %210 = arith.select %197, %149, %209 : vector<2x128xi1>, vector<2x128xf32>
    %c0_77 = arith.constant 0 : index
    %c2_78 = arith.constant 2 : index
    %c0_79 = arith.constant 0 : index
    %c0_80 = arith.constant 0 : index
    %211 = vector.load %arg5[%c0_77, %c2_78, %c0_79, %c0_80] : memref<1x3x2x128xf32, #tpu.memory_space<vmem>>, vector<1x1x2x128xf32>
    %212 = vector.shape_cast %211 : vector<1x1x2x128xf32> to vector<2x128xf32>
    %213 = vector.shape_cast %210 : vector<2x128xf32> to vector<1x1x2x128xf32>
    tpu.vector_store %arg5[%c0_77, %c2_78, %c0_79, %c0_80], %213 {strides = array<i32>} : memref<1x3x2x128xf32, #tpu.memory_space<vmem>>, vector<1x1x2x128xf32>,
    return
  }
  func.func @transform_0(%arg0: i32, %arg1: i32) -> i32 {
    %c0_i32 = arith.constant 0 : i32
    %c0_i32_0 = arith.constant 0 : i32
    return %c0_i32 : i32
  }
  func.func @transform_1(%arg0: i32, %arg1: i32) -> i32 {
    %c0_i32 = arith.constant 0 : i32
    %c0_i32_0 = arith.constant 0 : i32
    return %c0_i32 : i32
  }
  func.func @transform_2(%arg0: i32, %arg1: i32) -> (i32, i32, i32, i32) {
    %c0_i32 = arith.constant 0 : i32
    %c0_i32_0 = arith.constant 0 : i32
    %c0_i32_1 = arith.constant 0 : i32
    return %arg0, %c0_i32, %arg1, %c0_i32_0 : i32, i32, i32, i32
  }
  func.func @transform_3(%arg0: i32, %arg1: i32) -> (i32, i32, i32, i32) {
    %c0_i32 = arith.constant 0 : i32
    %c0_i32_0 = arith.constant 0 : i32
    %c0_i32_1 = arith.constant 0 : i32
    return %arg0, %c0_i32, %arg1, %c0_i32_0 : i32, i32, i32, i32
  }
}

</mosaic_0001>

<llo_original>
// kernel: tpu_custom_call.1
$region0: #{tpu_custom_call.1}
  #allocation0 [shape = 'u32[]', space=smem, size = 0x4, offset = 0x4, fixed_abs, tag = 'smem constant byte address 0x4 - core index']
  #allocation1 [shape = 'u32[144,128]{1,0:T(1,128)}', space=vmem, size = 0x12000, scoped, tag = 'internal scratch']
  %s0 = inlined_call_operand.hbm [shape: f32[4], index: 0, kind: input, shape index: {}]
  %s1 = inlined_call_operand.vmem [shape: f32[2], index: 1, kind: input, shape index: {}]
  %s2 = inlined_call_operand.hbm [shape: f32[2,3,2,128], index: 2, kind: input, shape index: {}]
  %s3 = inlined_call_operand.hbm [shape: f32[2,3,2,128], index: 3, kind: output, shape index: {}]
  %s4 = sld [smem:[#allocation0]]
  $region57: #{tpu_custom_call.1} parent=0
    _
  %s6 = ssub.s32 1, %s4
  %s7 = scalar_select 0, %s6, %s4
  $region1: #{tpu_custom_call.1} parent=0
    #allocation2 [shape = 'u8[512]{0}', space=smem, size = 0x200, scoped, tag = 'input window, operand 0, single buffered']
    #allocation3 [shape = 's32[2]{0}', space=sflag, size = 0x8, scoped, tag = 'scoped memory for tpu_custom_call.1']
    #allocation4 [shape = 's32[2]{0}', space=sflag, size = 0x8, scoped, tag = 'scoped memory for tpu_custom_call.1']
    #allocation5 [shape = 's32[2]{0}', space=sflag, size = 0x8, scoped, tag = 'scoped memory for tpu_custom_call.1']
    #allocation6 [shape = 's32[2]{0}', space=sflag, size = 0x8, scoped, tag = 'scoped memory for tpu_custom_call.1']
    #allocation7 [shape = 'u8[512]{0}', space=smem, size = 0x200, scoped, tag = 'input window, operand 1, single buffered']
    #allocation8 [shape = 'u8[6144]{0}', space=vmem, size = 0x1800, scoped, tag = 'input window, operand 2']
    #allocation9 [shape = 'u8[6144]{0}', space=vmem, size = 0x1800, scoped, tag = 'output window, operand 0']
    %8 = vsyncpa [#allocation5], 0
    %9 = vsyncpa [#allocation6], 0
    %10 = vsyncpa [#allocation3], 0
    %s11 = scalar_lea.sflag [#allocation3], 1
    %12 = vsyncpa %s11, 0
    %13 = vsyncpa [#allocation4], 0
    %s14 = scalar_lea.sflag [#allocation4], 1
    %15 = vsyncpa %s14, 0
    loop: start=0, step=1, limit=4
    $region2: #{tpu_custom_call.1} parent=1 // loop_pre_header
      _
    $region3: #{tpu_custom_call.1} parent=1 // loop_header
      %s17 = sphi 0, %s21
      %p18 = scmp.ge.s32.totalorder %s17, 4
      %s24 = sphi 0, %s36
      %s25 = sphi 0, %s32
      %s26 = sphi 0, %s24
      %s27 = sphi 0, %s25
      %s28 = sphi 0, %s26
      %s29 = sphi 0, %s27
      %s37 = sphi 0, %s37
      %s39 = sphi 0, %s37
      %s40 = sphi 0, %s39
      %s54 = sphi 0, %s40
      %s58 = sphi 0, %s58
      %s60 = sphi 0, %s58
      %s61 = sphi 0, %s60
      %s75 = sphi 0, %s61
      %s83 = sphi 0, %s85
      %s86 = sphi 0, %s83
      %s87 = sphi 0, %s86
      %s103 = sphi 0, %s87
      %s111 = sphi 0, %s113
      %s114 = sphi 0, %s111
      %s115 = sphi 0, %s114
      %s131 = sphi 0, %s115
    $region4: #{tpu_custom_call.1} parent=1 // loop_header_branch
      %20 = sbr.rel (%p18) target = $region8
    $region5: #{tpu_custom_call.1} parent=1 // loop_body
      %s22 = ssub.s32 %s17, 1
      %s23 = ssub.s32 %s17, 2
      %s30 = sadd.s32 1, %s25
      %p31 = scmp.ge.s32.totalorder %s30, 1
      %s32 = scalar_select %p31, 0, %s30
      %s33 = sadd.s32 1, %s24
      %s34 = scalar_select %p31, %s33, %s24
      %p35 = scmp.ge.s32.totalorder %s34, 2
      %s36 = scalar_select %p35, 0, %s34
      %s38 = sadd.s32 %s37, 1
      %p41 = scmp.eq.s32.totalorder %s17, 1
      %p42 = scmp.ne.s32.totalorder %s37, %s39
      %p43 = scmp.eq.s32.totalorder %s17, 0
      %p44 = por %p42, %p43
      %p45 = scmp.ne.s32.totalorder %s37, %s39
      %p46 = scmp.eq.s32.totalorder %s22, 1
      %p47 = por %p45, %p46
      %p48 = scmp.ne.s32.totalorder %s39, %s40
      %p49 = scmp.eq.s32.totalorder %s22, 0
      %p50 = por %p48, %p49
      %p51 = scmp.ne.s32.totalorder %s39, %s40
      %p52 = scmp.eq.s32.totalorder %s23, 1
      %p53 = por %p51, %p52
      %p55 = scmp.ne.s32.totalorder %s40, %s54
      %p56 = scmp.eq.s32.totalorder %s23, 0
      %p57 = por %p55, %p56
      %s59 = sadd.s32 %s58, 1
      %p62 = scmp.eq.s32.totalorder %s17, 1
      %p63 = scmp.ne.s32.totalorder %s58, %s60
      %p64 = scmp.eq.s32.totalorder %s17, 0
      %p65 = por %p63, %p64
      %p66 = scmp.ne.s32.totalorder %s58, %s60
      %p67 = scmp.eq.s32.totalorder %s22, 1
      %p68 = por %p66, %p67
      %p69 = scmp.ne.s32.totalorder %s60, %s61
      %p70 = scmp.eq.s32.totalorder %s22, 0
      %p71 = por %p69, %p70
      %p72 = scmp.ne.s32.totalorder %s60, %s61
      %p73 = scmp.eq.s32.totalorder %s23, 1
      %p74 = por %p72, %p73
      %p76 = scmp.ne.s32.totalorder %s61, %s75
      %p77 = scmp.eq.s32.totalorder %s23, 0
      %p78 = por %p76, %p77
      %s79 = ssub.s32 %s24, %s36
      %s80 = ssub.s32 %s25, %s32
      %s81 = sor.u32 %s79, %s80
      %p82 = scmp.eq.s32.totalorder %s81, 0
      %s84 = sadd.s32 %s83, 1
      %s85 = scalar_select %p82, %s83, %s84
      %p88 = pneg %p82
      %p89 = scmp.eq.s32.totalorder %s17, 1
      %p90 = por %p88, %p89
      %p91 = scmp.ne.s32.totalorder %s83, %s86
      %p92 = scmp.eq.s32.totalorder %s17, 0
      %p93 = por %p91, %p92
      %p94 = scmp.ne.s32.totalorder %s83, %s86
      %p95 = scmp.eq.s32.totalorder %s22, 1
      %p96 = por %p94, %p95
      %p97 = scmp.ne.s32.totalorder %s86, %s87
      %p98 = scmp.eq.s32.totalorder %s22, 0
      %p99 = por %p97, %p98
      %p100 = scmp.ne.s32.totalorder %s86, %s87
      %p101 = scmp.eq.s32.totalorder %s23, 1
      %p102 = por %p100, %p101
      %p104 = scmp.ne.s32.totalorder %s87, %s103
      %p105 = scmp.eq.s32.totalorder %s23, 0
      %p106 = por %p104, %p105
      %s107 = ssub.s32 %s24, %s36
      %s108 = ssub.s32 %s25, %s32
      %s109 = sor.u32 %s107, %s108
      %p110 = scmp.eq.s32.totalorder %s109, 0
      %s112 = sadd.s32 %s111, 1
      %s113 = scalar_select %p110, %s111, %s112
      %p116 = pneg %p110
      %p117 = scmp.eq.s32.totalorder %s17, 1
      %p118 = por %p116, %p117
      %p119 = scmp.ne.s32.totalorder %s111, %s114
      %p120 = scmp.eq.s32.totalorder %s17, 0
      %p121 = por %p119, %p120
      %p122 = scmp.ne.s32.totalorder %s111, %s114
      %p123 = scmp.eq.s32.totalorder %s22, 1
      %p124 = por %p122, %p123
      %p125 = scmp.ne.s32.totalorder %s114, %s115
      %p126 = scmp.eq.s32.totalorder %s22, 0
      %p127 = por %p125, %p126
      %p128 = scmp.ne.s32.totalorder %s114, %s115
      %p129 = scmp.eq.s32.totalorder %s23, 1
      %p130 = por %p128, %p129
      %p132 = scmp.ne.s32.totalorder %s115, %s131
      %p133 = scmp.eq.s32.totalorder %s23, 0
      %p134 = por %p132, %p133
      %p135 = scmp.le.s32.totalorder 1, %s17
      %p136 = scmp.lt.s32.totalorder %s17, 3
      %p137 = pnand %p135, %p136
      %p138 = pneg %p137
      // Predicated region
      $region9: #{tpu_custom_call.1} parent=5 // pred_check
        _
      $region10: #{tpu_custom_call.1} parent=5 // pred_check_branch
        %140 = sbr.rel (%p137) target = $region12
      $region11: #{tpu_custom_call.1} parent=5 // pred_region
        %s141 = ssub.s32 %s17, 1
        // Predicated region
        $region13: #{tpu_custom_call.1} parent=11 // pred_check
          %p142 = pneg %p50
        $region14: #{tpu_custom_call.1} parent=11 // pred_check_branch
          %144 = sbr.rel (%p142) target = $region16
        $region15: #{tpu_custom_call.1} parent=11 // pred_region
          %s146 = ssub.s32 16, 16
          %147 = vsyncadd [#allocation5], %s146
          %150 = dma.hbm_to_smem %s0, 16, [#allocation2], [#allocation5]
        $region16: #{tpu_custom_call.1} parent=11 // pred_fallthru
          _
        // Predicated region
        $region17: #{tpu_custom_call.1} parent=11 // pred_check
          %p151 = pneg %p71
        $region18: #{tpu_custom_call.1} parent=11 // pred_check_branch
          %153 = sbr.rel (%p151) target = $region20
        $region19: #{tpu_custom_call.1} parent=11 // pred_region
          %s155 = ssub.s32 16, 16
          %156 = vsyncadd [#allocation6], %s155
          %s158 = sshll.u32 %s1, 4
          %s159 = int_to_ptr.vmem [resolvable:$true] %s158
          %161 = dma.vmem_to_smem %s159, 16, [#allocation7], [#allocation6]
        $region20: #{tpu_custom_call.1} parent=11 // pred_fallthru
          _
      $region12: #{tpu_custom_call.1} parent=5 // pred_fallthru
        _
      %p162 = scmp.lt.s32.totalorder %s17, 2
      // Predicated region
      $region21: #{tpu_custom_call.1} parent=5 // pred_check
        %p163 = pneg %p162
      $region22: #{tpu_custom_call.1} parent=5 // pred_check_branch
        %165 = sbr.rel (%p163) target = $region24
      $region23: #{tpu_custom_call.1} parent=5 // pred_region
        // Predicated region
        $region25: #{tpu_custom_call.1} parent=23 // pred_check
          %p166 = pneg %p93
        $region26: #{tpu_custom_call.1} parent=23 // pred_check_branch
          %168 = sbr.rel (%p166) target = $region28
        $region27: #{tpu_custom_call.1} parent=23 // pred_region
          %s169 = sand.u32 %s83, 1
          %s170 = scalar_lea.sflag [#allocation3], %s169
          %s171 = sand.u32 %s83, 1
          %s172 = smul.addr %s171, 6
          %s173 = scalar_lea.vmem [#allocation8], %s172
          %s175 = ssub.s32 96, 96
          %176 = vsyncadd %s170, %s175
          %s177 = smul.addr %s24, 3
          %s178 = sadd.s32 %s25, %s177
          %s179 = smul.addr %s178, 32
          %s180 = scalar_lea.hbm %s2, %s179
          %s181 = sshll.u32 %s173, 4
          %s182 = int_to_ptr.vmem [resolvable:$true] %s181
          %187 = dma.hbm_to_vmem [thread:$0]  %s180, 96, %s182, %s170, 32, 32, 2
        $region28: #{tpu_custom_call.1} parent=23 // pred_fallthru
          _
      $region24: #{tpu_custom_call.1} parent=5 // pred_fallthru
        _
      %p188 = scmp.le.s32.totalorder 1, %s17
      %p189 = scmp.lt.s32.totalorder %s17, 3
      %p190 = pnand %p188, %p189
      %p191 = pneg %p190
      // Predicated region
      $region29: #{tpu_custom_call.1} parent=5 // pred_check
        _
      $region30: #{tpu_custom_call.1} parent=5 // pred_check_branch
        %193 = sbr.rel (%p190) target = $region32
      $region31: #{tpu_custom_call.1} parent=5 // pred_region
        %s194 = ssub.s32 %s17, 1
        // Predicated region
        $region33: #{tpu_custom_call.1} parent=31 // pred_check
          %p195 = pneg %p50
        $region34: #{tpu_custom_call.1} parent=31 // pred_check_branch
          %197 = sbr.rel (%p195) target = $region36
        $region35: #{tpu_custom_call.1} parent=31 // pred_region
          %198 = dma.done [#allocation5], 16
        $region36: #{tpu_custom_call.1} parent=31 // pred_fallthru
          _
        // Predicated region
        $region37: #{tpu_custom_call.1} parent=31 // pred_check
          %p199 = pneg %p71
        $region38: #{tpu_custom_call.1} parent=31 // pred_check_branch
          %201 = sbr.rel (%p199) target = $region40
        $region39: #{tpu_custom_call.1} parent=31 // pred_region
          %202 = dma.done [#allocation6], 16
        $region40: #{tpu_custom_call.1} parent=31 // pred_fallthru
          _
        %s203 = sand.u32 %s86, 1
        %s204 = scalar_lea.sflag [#allocation3], %s203
        %s205 = sand.u32 %s86, 1
        %s206 = smul.addr %s205, 6
        %s207 = scalar_lea.vmem [#allocation8], %s206
        // Predicated region
        $region41: #{tpu_custom_call.1} parent=31 // pred_check
          %p208 = pneg %p99
        $region42: #{tpu_custom_call.1} parent=31 // pred_check_branch
          %210 = sbr.rel (%p208) target = $region44
        $region43: #{tpu_custom_call.1} parent=31 // pred_region
          %211 = dma.done %s204, 96
        $region44: #{tpu_custom_call.1} parent=31 // pred_fallthru
          _
        %212 = sfence
        %p213 = pneg %p50
        %p214 = pneg %p47
        %p215 = pneg %p71
        %p216 = pneg %p68
        %s217 = sand.u32 %s86, 1
        %s218 = scalar_lea.sflag [#allocation3], %s217
        %s219 = sand.u32 %s86, 1
        %s220 = smul.addr %s219, 6
        %s221 = scalar_lea.vmem [#allocation8], %s220
        %p222 = pneg %p99
        %p223 = pneg %p96
        %p224 = pneg %p127
        %p225 = pneg %p124
        %s226 = sand.u32 %s114, 1
        %s227 = scalar_lea.sflag [#allocation4], %s226
        %s228 = sand.u32 %s114, 1
        %s229 = smul.addr %s228, 6
        %s230 = scalar_lea.vmem [#allocation9], %s229
        %s231 = sld [smem:[#allocation2]]
        %s232 = sld [smem:[#allocation2 + $0x1]]
        %s233 = sld [smem:[#allocation2 + $0x2]]
        %s234 = sld [smem:[#allocation2 + $0x3]]
        %s235 = sld [smem:[#allocation7 + %s26]]
        %v236 = vld [vmem:[%s207] sm:$0x3]
        %s237 = scalar_lea.vmem %s207, 2 [#allocation8]
        %v238 = vld [vmem:[%s237] sm:$0x3]
        %s239 = scalar_lea.vmem %s207, 4 [#allocation8]
        %v240 = vld [vmem:[%s239] sm:$0x3]
        %v241 = vstv %s231
        %v242 = vmul.f32 %v236, %v241
        %v243 = vmax.f32 %v242, 0.0
        %v244 = vmin.f32 %v243, 1.0
        %v245 = vmul.f32 %v238, %v241
        %v246 = vmax.f32 %v245, 0.0
        %v247 = vmin.f32 %v246, 1.0
        %v248 = vmul.f32 %v240, %v241
        %v249 = vmax.f32 %v248, 0.0
        %v250 = vmin.f32 %v249, 1.0
        %s251 = ssub.f32 1.0, %s232
        %s252 = smul.f32 %s251, %s235
        %v253 = vstv %s232
        %v254 = vmul.f32 %v253, %v244
        %v255 = vstv %s252
        %v256 = vadd.f32 %v254, %v255
        %v257 = vmax.f32 %v256, 0.0
        %v258 = vmin.f32 %v257, 1.0
        %v259 = vmul.f32 %v253, %v247
        %v260 = vadd.f32 %v259, %v255
        %v261 = vmax.f32 %v260, 0.0
        %v262 = vmin.f32 %v261, 1.0
        %v263 = vmul.f32 %v253, %v250
        %v264 = vadd.f32 %v263, %v255
        %v265 = vmax.f32 %v264, 0.0
        %v266 = vmin.f32 %v265, 1.0
        %v267 = vmul.f32 %v258, 0.2989
        %v268 = vmul.f32 %v262, 0.587
        %v269 = vadd.f32 %v267, %v268
        %v270 = vmul.f32 %v266, 0.114
        %v271 = vadd.f32 %v269, %v270
        %s272 = ssub.f32 1.0, %s233
        %v273 = vstv %s272
        %v274 = vmul.f32 %v273, %v271
        %v275 = vstv %s233
        %v276 = vmul.f32 %v275, %v258
        %v277 = vadd.f32 %v276, %v274
        %v278 = vmax.f32 %v277, 0.0
        %v279 = vmin.f32 %v278, 1.0
        %v280 = vmul.f32 %v275, %v262
        %v281 = vadd.f32 %v280, %v274
        %v282 = vmax.f32 %v281, 0.0
        %v283 = vmin.f32 %v282, 1.0
        %v284 = vmul.f32 %v275, %v266
        %v285 = vadd.f32 %v284, %v274
        %v286 = vmax.f32 %v285, 0.0
        %v287 = vmin.f32 %v286, 1.0
        %v288 = vmax.f32 %v279, %v283
        %v289 = vmax.f32 %v288, %v287
        %v290 = vmin.f32 %v279, %v283
        %v291 = vmin.f32 %v290, %v287
        %vm292 = vcmp.eq.f32.partialorder %v289, %v291
        %v293 = vsub.f32 %v289, %v291
        %v294 = vsel %vm292, 1.0, %v289
        %v295 = vrcp.pop %v294
        %v296 = vmul.f32 %v293, %v295
        %v297 = vmin.f32 %v296, 1.0
        %v298 = vsel %vm292, 1.0, %v293
        %v299 = vrcp.pop %v298
        %v300 = vsub.f32 %v289, %v279
        %v301 = vmul.f32 %v300, %v299
        %v302 = vsub.f32 %v289, %v283
        %v303 = vmul.f32 %v302, %v299
        %v304 = vsub.f32 %v289, %v287
        %v305 = vmul.f32 %v304, %v299
        %vm306 = vcmp.eq.f32.partialorder %v289, %v279
        %vm307 = vcmp.eq.f32.partialorder %v289, %v283
        %v308 = vsub.f32 %v305, %v303
        %v309 = vsel %vm306, %v308, 0.0
        %vm310 = vmxor %vm306, 1
        %vm311 = vmand %vm307, %vm310
        %v312 = vadd.f32 %v301, 2.0
        %v313 = vsub.f32 %v312, %v305
        %v314 = vsel %vm311, %v313, 0.0
        %vm315 = vmxor %vm307, 1
        %vm316 = vmand %vm315, %vm310
        %v317 = vadd.f32 %v303, 4.0
        %v318 = vsub.f32 %v317, %v301
        %v319 = vsel %vm316, %v318, 0.0
        %v320 = vadd.f32 %v309, %v314
        %v321 = vadd.f32 %v320, %v319
        %s322 = smul.f32 %s234, 6.0
        %v323 = vstv %s322
        %v324 = vadd.f32 %v321, %v323
        %vm325 = vcmp.lt.f32.partialorder %v324, 0.0
        %v326 = vadd.f32 %v324, 6.0
        %v327 = vsel %vm325, %v326, %v324
        %vm328 = vcmp.ge.f32.partialorder %v327, 6.0
        %v329 = vsub.f32 %v327, 6.0
        %v330 = vsel %vm328, %v329, %v327
        %v331 = vfloor.f32 %v330
        %v332 = vsub.f32 %v330, %v331
        %v333 = vmin.f32 %v331, 5.0
        %v334 = vsub.f32 1.0, %v297
        %v335 = vmul.f32 %v289, %v334
        %v336 = vmul.f32 %v297, %v332
        %v337 = vsub.f32 1.0, %v336
        %v338 = vmul.f32 %v289, %v337
        %v339 = vsub.f32 1.0, %v332
        %v340 = vmul.f32 %v297, %v339
        %v341 = vsub.f32 1.0, %v340
        %v342 = vmul.f32 %v289, %v341
        %vm343 = vcmp.eq.f32.partialorder %v333, 0.0
        %vm344 = vcmp.eq.f32.partialorder %v333, 1.0
        %vm345 = vcmp.eq.f32.partialorder %v333, 2.0
        %vm346 = vcmp.eq.f32.partialorder %v333, 3.0
        %vm347 = vcmp.eq.f32.partialorder %v333, 4.0
        %v348 = vsel %vm347, %v342, %v289
        %v349 = vsel %vm346, %v335, %v348
        %v350 = vsel %vm345, %v335, %v349
        %v351 = vsel %vm344, %v338, %v350
        %v352 = vsel %vm343, %v289, %v351
        %353 = vst [vmem:[%s230] sm:$0x3] %v352
        %v354 = vsel %vm346, %v338, %v335
        %v355 = vsel %vm345, %v289, %v354
        %v356 = vsel %vm344, %v289, %v355
        %v357 = vsel %vm343, %v342, %v356
        %s358 = scalar_lea.vmem %s230, 2 [#allocation9]
        %359 = vst [vmem:[%s358] sm:$0x3] %v357
        %v360 = vsel %vm347, %v289, %v338
        %v361 = vsel %vm346, %v289, %v360
        %v362 = vsel %vm345, %v342, %v361
        %v363 = vsel %vm344, %v335, %v362
        %v364 = vsel %vm343, %v335, %v363
        %s365 = scalar_lea.vmem %s230, 4 [#allocation9]
        %366 = vst [vmem:[%s365] sm:$0x3] %v364
        %s367 = sand.u32 %s114, 1
        %s368 = scalar_lea.sflag [#allocation4], %s367
        %s369 = sand.u32 %s114, 1
        %s370 = smul.addr %s369, 6
        %s371 = scalar_lea.vmem [#allocation9], %s370
        // Predicated region
        $region45: #{tpu_custom_call.1} parent=31 // pred_check
          %p372 = pneg %p124
        $region46: #{tpu_custom_call.1} parent=31 // pred_check_branch
          %374 = sbr.rel (%p372) target = $region48
        $region47: #{tpu_custom_call.1} parent=31 // pred_region
          %s376 = ssub.s32 96, 96
          %377 = vsyncadd %s368, %s376
          %s378 = smul.addr %s26, 3
          %s379 = sadd.s32 %s27, %s378
          %s380 = smul.addr %s379, 32
          %s381 = scalar_lea.hbm %s3, %s380
          %s382 = sshll.u32 %s371, 4
          %s383 = int_to_ptr.vmem [resolvable:$true] %s382
          %388 = dma.vmem_to_hbm [thread:$0]  %s383, 96, %s381, %s368, 32, 32, 2
        $region48: #{tpu_custom_call.1} parent=31 // pred_fallthru
          _
      $region32: #{tpu_custom_call.1} parent=5 // pred_fallthru
        _
      %p389 = scmp.le.s32.totalorder 2, %s17
      // Predicated region
      $region49: #{tpu_custom_call.1} parent=5 // pred_check
        %p390 = pneg %p389
      $region50: #{tpu_custom_call.1} parent=5 // pred_check_branch
        %392 = sbr.rel (%p390) target = $region52
      $region51: #{tpu_custom_call.1} parent=5 // pred_region
        %s393 = ssub.s32 %s17, 2
        // Predicated region
        $region53: #{tpu_custom_call.1} parent=51 // pred_check
          %p394 = pneg %p130
        $region54: #{tpu_custom_call.1} parent=51 // pred_check_branch
          %396 = sbr.rel (%p394) target = $region56
        $region55: #{tpu_custom_call.1} parent=51 // pred_region
          %s397 = sand.u32 %s115, 1
          %s398 = scalar_lea.sflag [#allocation4], %s397
          %s399 = sand.u32 %s115, 1
          %s400 = smul.addr %s399, 6
          %s401 = scalar_lea.vmem [#allocation9], %s400
          %402 = dma.done %s398, 96
        $region56: #{tpu_custom_call.1} parent=51 // pred_fallthru
          _
      $region52: #{tpu_custom_call.1} parent=5 // pred_fallthru
        _
    $region6: #{tpu_custom_call.1} parent=1 // loop_footer
      %s21 = sadd.s32 1, %s17
    $region7: #{tpu_custom_call.1} parent=1 // loop_footer_branch
      %16 = sbr.rel target = $region3
    $region8: #{tpu_custom_call.1} parent=1 // loop_exit
      _
    %403 = vsyncpa [#allocation3], 1
    %s404 = scalar_lea.sflag [#allocation3], 1
    %405 = vsyncpa %s404, 1
    %406 = vsyncpa [#allocation4], 1
    %s407 = scalar_lea.sflag [#allocation4], 1
    %408 = vsyncpa %s407, 1
    %409 = vsyncpa [#allocation5], 1
    %s410 = scalar_lea.sflag [#allocation5], 1
    %411 = vsyncpa %s410, 1
    %412 = vsyncpa [#allocation6], 1
    %s413 = scalar_lea.sflag [#allocation6], 1
    %414 = vsyncpa %s413, 1

</llo_original>
